<compile_context>
chip_gen: v5e
topology: v5e:2x2
jax: 0.10.0
libtpu: 0.0.40
codegen_flags: <defaults>
</compile_context>

<pallas_src>
import jax
import jax.numpy as jnp
from jax.experimental import pallas as pl
from jax.experimental.pallas import tpu as pltpu

IN_DIM = 80
HID_DIM = 40
HID_PAD = 128   # hidden dim padded to one full lane width
OUT_DIM = 10


def _round_up(n, m):
    return ((n + m - 1) // m) * m


def net_head_kernel(x_ref, w2_ref, b2_ref, w3_ref, b3_ref, o_ref):
    """One batch tile.

    x_ref:  (TB, 80)    w2_ref: (80, 128)  b2_ref: (1, 128)
    w3_ref: (128, 10)   b3_ref: (1, 10)    o_ref:  (TB, 10)
    """
    x = x_ref[...]

    # fc2 + relu: MXU matmul with f32 accumulation, bias/relu on the VPU.
    h = jnp.dot(x, w2_ref[...], preferred_element_type=jnp.float32) + b2_ref[...]
    h = jnp.maximum(h, 0.0)

    # fc3 (padded rows of w3 are zero, so the 128-wide h is exact).
    logits = (
        jnp.dot(h.astype(w3_ref.dtype), w3_ref[...],
                preferred_element_type=jnp.float32)
        + b3_ref[...]
    )

    # Numerically-stable log-softmax over the last (10-wide) dim.
    m = jnp.max(logits, axis=-1, keepdims=True)
    shifted = logits - m
    lse = jnp.log(jnp.sum(jnp.exp(shifted), axis=-1, keepdims=True))
    o_ref[...] = (shifted - lse).astype(o_ref.dtype)


def prepare_params(w2, b2, w3, b3, dtype=jnp.float32):
    """One-time conversion from PyTorch layout (out_features, in_features) to
    kernel layout, with the 40-wide hidden dim zero-padded to 128 lanes."""
    w2_t = jnp.zeros((IN_DIM, HID_PAD), dtype).at[:, :HID_DIM].set(w2.T.astype(dtype))
    b2_p = jnp.zeros((1, HID_PAD), dtype).at[:, :HID_DIM].set(b2.astype(dtype))
    w3_t = jnp.zeros((HID_PAD, OUT_DIM), dtype).at[:HID_DIM, :].set(w3.T.astype(dtype))
    b3_p = b3.reshape(1, OUT_DIM).astype(dtype)
    return w2_t, b2_p, w3_t, b3_p


def net_head_forward(x, params, *, tb=512, vmem_limit_bytes=None):
    """x: (B, 80). params: output of prepare_params()."""
    w2_t, b2_p, w3_t, b3_p = params
    B, d = x.shape
    assert d == IN_DIM, f"expected last dim {IN_DIM}, got {d}"
    if x.dtype != w2_t.dtype:
        x = x.astype(w2_t.dtype)

    # Batch tile: a multiple of 8 (sublane), capped at `tb`. Default 512 keeps
    # the double-buffered tiles tiny relative to every generation's VMEM.
    tb_eff = min(_round_up(tb, 8), _round_up(B, 8))
    bp = _round_up(B, tb_eff)
    if bp != B:
        x = jnp.pad(x, ((0, bp - B), (0, 0)))  # padded rows sliced off below

    grid = (bp // tb_eff,)

    itemsize = jnp.dtype(x.dtype).itemsize
    weight_bytes = sum(int(a.size) * a.dtype.itemsize
                       for a in (w2_t, b2_p, w3_t, b3_p))
    cost = pl.CostEstimate(
        flops=2 * bp * (IN_DIM * HID_PAD + HID_PAD * OUT_DIM),
        transcendentals=bp * (OUT_DIM + 1),
        bytes_accessed=bp * (IN_DIM * itemsize + OUT_DIM * 4) + weight_bytes,
    )

    # Weights stay resident across the whole grid (constant block index).
    full = lambda arr: pl.BlockSpec(arr.shape, lambda i: (0, 0))

    out = pl.pallas_call(
        net_head_kernel,
        out_shape=jax.ShapeDtypeStruct((bp, OUT_DIM), jnp.float32),
        grid_spec=pltpu.PrefetchScalarGridSpec(
            num_scalar_prefetch=0,
            grid=grid,
            in_specs=[
                pl.BlockSpec((tb_eff, IN_DIM), lambda i: (i, 0)),  # x: batch-tiled
                full(w2_t), full(b2_p), full(w3_t), full(b3_p),
            ],
            out_specs=pl.BlockSpec((tb_eff, OUT_DIM), lambda i: (i, 0)),
        ),
        compiler_params=pltpu.CompilerParams(
            dimension_semantics=("parallel",),   # megacore sharding on v7x
            vmem_limit_bytes=vmem_limit_bytes,
        ),
        cost_estimate=cost,
    )(x, w2_t, b2_p, w3_t, b3_p)

    return out[:B] if bp != B else out


def init_params(key):
    """Deterministic synthetic params with PyTorch nn.Linear shapes."""
    k1, k2, k3, k4 = jax.random.split(key, 4)
    w2 = jax.random.uniform(k1, (HID_DIM, IN_DIM), jnp.float32, -1.0 / IN_DIM**0.5, 1.0 / IN_DIM**0.5)
    b2 = jax.random.uniform(k2, (HID_DIM,), jnp.float32, -1.0 / IN_DIM**0.5, 1.0 / IN_DIM**0.5)
    w3 = jax.random.uniform(k3, (OUT_DIM, HID_DIM), jnp.float32, -1.0 / HID_DIM**0.5, 1.0 / HID_DIM**0.5)
    b3 = jax.random.uniform(k4, (OUT_DIM,), jnp.float32, -1.0 / HID_DIM**0.5, 1.0 / HID_DIM**0.5)
    return w2, b2, w3, b3


def reference_forward(x, w2, b2, w3, b3):
    h = jnp.maximum(x @ w2.T + b2, 0.0)
    logits = h @ w3.T + b3
    return jax.nn.log_softmax(logits, axis=-1)


if __name__ == "__main__":
    key = jax.random.PRNGKey(0)
    kx, kp = jax.random.split(key)

    w2, b2, w3, b3 = init_params(kp)
    params = prepare_params(w2, b2, w3, b3)  # transpose/pad hoisted out of the hot path

    # Small primary check (single tile).
    B = 8
    x = jax.random.normal(kx, (B, IN_DIM), jnp.float32)
    out = net_head_forward(x, params)
    out = jax.block_until_ready(out)
    ref = reference_forward(x, w2, b2, w3, b3)
    assert out.shape == (B, OUT_DIM)
    assert jnp.allclose(out, ref, atol=1e-5, rtol=1e-5), "mismatch vs reference (B=8)"

    # Exercise the tiled + tail-padded path (B not a multiple of the tile).
    B2 = 40
    x2 = jax.random.normal(jax.random.PRNGKey(1), (B2, IN_DIM), jnp.float32)
    out2 = jax.block_until_ready(net_head_forward(x2, params, tb=16))
    ref2 = reference_forward(x2, w2, b2, w3, b3)
    assert out2.shape == (B2, OUT_DIM)
    assert jnp.allclose(out2, ref2, atol=1e-5, rtol=1e-5), "mismatch vs reference (tiled)"

    print("KERNEL_OK")
</pallas_src>

<mosaic_0001>
module attributes {stable_mosaic.version = 11 : i64} {
  func.func @net_head_kernel(%arg0: i32, %arg1: memref<8x80xf32, #tpu.memory_space<vmem>>, %arg2: memref<80x128xf32, #tpu.memory_space<vmem>>, %arg3: memref<1x128xf32, #tpu.memory_space<vmem>>, %arg4: memref<128x10xf32, #tpu.memory_space<vmem>>, %arg5: memref<1x10xf32, #tpu.memory_space<vmem>>, %arg6: memref<8x10xf32, #tpu.memory_space<vmem>>) attributes {dimension_semantics = [#tpu.dimension_semantics<parallel>], iteration_bounds = array<i64: 1>, scalar_prefetch = 0 : i64, scratch_operands = 0 : i64, tpu.core_type = #tpu.core_type<tc>, window_params = [{transform_indices = @transform_0, window_bounds = array<i64: 8, 80>}, {pipeline_mode = #tpu.pipeline_mode<synchronous>, transform_indices = @transform_1, window_bounds = array<i64: 80, 128>}, {pipeline_mode = #tpu.pipeline_mode<synchronous>, transform_indices = @transform_2, window_bounds = array<i64: 1, 128>}, {pipeline_mode = #tpu.pipeline_mode<synchronous>, transform_indices = @transform_3, window_bounds = array<i64: 128, 10>}, {pipeline_mode = #tpu.pipeline_mode<synchronous>, transform_indices = @transform_4, window_bounds = array<i64: 1, 10>}, {transform_indices = @transform_5, window_bounds = array<i64: 8, 10>}]} {
    %c0 = arith.constant 0 : index
    %c0_0 = arith.constant 0 : index
    %0 = vector.load %arg1[%c0, %c0_0] : memref<8x80xf32, #tpu.memory_space<vmem>>, vector<8x80xf32>
    %c0_1 = arith.constant 0 : index
    %c0_2 = arith.constant 0 : index
    %1 = vector.load %arg2[%c0_1, %c0_2] : memref<80x128xf32, #tpu.memory_space<vmem>>, vector<80x128xf32>
    %cst = arith.constant dense<0.000000e+00> : vector<8x128xf32>
    %2 = tpu.matmul %0, %1, %cst {dimension_numbers = #tpu.dot_dimension_numbers<[1], [0], [0], [1], [0, 0, 1, 1], [], []>} : vector<8x80xf32>, vector<80x128xf32>, vector<8x128xf32> -> vector<8x128xf32>
    %c0_3 = arith.constant 0 : index
    %c0_4 = arith.constant 0 : index
    %3 = vector.load %arg3[%c0_3, %c0_4] : memref<1x128xf32, #tpu.memory_space<vmem>>, vector<1x128xf32>
    %4 = vector.broadcast %3 : vector<1x128xf32> to vector<8x128xf32>
    %5 = arith.addf %2, %4 : vector<8x128xf32>
    %cst_5 = arith.constant 0.000000e+00 : f32
    %6 = vector.broadcast %cst_5 : f32 to vector<8x128xf32>
    %7 = arith.maximumf %5, %6 : vector<8x128xf32>
    %c0_6 = arith.constant 0 : index
    %c0_7 = arith.constant 0 : index
    %8 = vector.load %arg4[%c0_6, %c0_7] : memref<128x10xf32, #tpu.memory_space<vmem>>, vector<128x10xf32>
    %cst_8 = arith.constant dense<0.000000e+00> : vector<8x10xf32>
    %9 = tpu.matmul %7, %8, %cst_8 {dimension_numbers = #tpu.dot_dimension_numbers<[1], [0], [0], [1], [0, 0, 1, 1], [], []>} : vector<8x128xf32>, vector<128x10xf32>, vector<8x10xf32> -> vector<8x10xf32>
    %c0_9 = arith.constant 0 : index
    %c0_10 = arith.constant 0 : index
    %10 = vector.load %arg5[%c0_9, %c0_10] : memref<1x10xf32, #tpu.memory_space<vmem>>, vector<1x10xf32>
    %11 = vector.broadcast %10 : vector<1x10xf32> to vector<8x10xf32>
    %12 = arith.addf %9, %11 : vector<8x10xf32>
    %cst_11 = arith.constant dense<0xFF800000> : vector<8xf32>
    %13 = vector.multi_reduction <maximumf>, %12, %cst_11 [1] : vector<8x10xf32> to vector<8xf32>
    %14 = vector.shape_cast %13 : vector<8xf32> to vector<8x1xf32>
    %15 = vector.broadcast %14 : vector<8x1xf32> to vector<8x10xf32>
    %16 = arith.subf %12, %15 : vector<8x10xf32>
    %17 = math.exp %16 : vector<8x10xf32>
    %cst_12 = arith.constant dense<0.000000e+00> : vector<8xf32>
    %18 = vector.multi_reduction <add>, %17, %cst_12 [1] : vector<8x10xf32> to vector<8xf32>
    %19 = vector.shape_cast %18 : vector<8xf32> to vector<8x1xf32>
    %20 = math.log %19 : vector<8x1xf32>
    %21 = vector.broadcast %20 : vector<8x1xf32> to vector<8x10xf32>
    %22 = arith.subf %16, %21 : vector<8x10xf32>
    %c0_13 = arith.constant 0 : index
    %c0_14 = arith.constant 0 : index
    %23 = vector.load %arg6[%c0_13, %c0_14] : memref<8x10xf32, #tpu.memory_space<vmem>>, vector<8x10xf32>
    tpu.vector_store %arg6[%c0_13, %c0_14], %22 {strides = array<i32>} : memref<8x10xf32, #tpu.memory_space<vmem>>, vector<8x10xf32>,
    return
  }
  func.func @transform_0(%arg0: i32) -> (i32, i32) {
    %c0_i32 = arith.constant 0 : i32
    %c0_i32_0 = arith.constant 0 : i32
    return %arg0, %c0_i32 : i32, i32
  }
  func.func @transform_1(%arg0: i32) -> (i32, i32) {
    %c0_i32 = arith.constant 0 : i32
    %c0_i32_0 = arith.constant 0 : i32
    %c0_i32_1 = arith.constant 0 : i32
    return %c0_i32, %c0_i32_0 : i32, i32
  }
  func.func @transform_2(%arg0: i32) -> (i32, i32) {
    %c0_i32 = arith.constant 0 : i32
    %c0_i32_0 = arith.constant 0 : i32
    %c0_i32_1 = arith.constant 0 : i32
    return %c0_i32, %c0_i32_0 : i32, i32
  }
  func.func @transform_3(%arg0: i32) -> (i32, i32) {
    %c0_i32 = arith.constant 0 : i32
    %c0_i32_0 = arith.constant 0 : i32
    %c0_i32_1 = arith.constant 0 : i32
    return %c0_i32, %c0_i32_0 : i32, i32
  }
  func.func @transform_4(%arg0: i32) -> (i32, i32) {
    %c0_i32 = arith.constant 0 : i32
    %c0_i32_0 = arith.constant 0 : i32
    %c0_i32_1 = arith.constant 0 : i32
    return %c0_i32, %c0_i32_0 : i32, i32
  }
  func.func @transform_5(%arg0: i32) -> (i32, i32) {
    %c0_i32 = arith.constant 0 : i32
    %c0_i32_0 = arith.constant 0 : i32
    return %arg0, %c0_i32 : i32, i32
  }
}

</mosaic_0001>

<llo_original>
// kernel: tpu_custom_call.1
$region0: #{tpu_custom_call.1}
  #allocation0 [shape = 'u32[]', space=smem, size = 0x4, offset = 0x4, fixed_abs, tag = 'smem constant byte address 0x4 - core index']
  #allocation1 [shape = 'u32[72,128]{1,0:T(1,128)}', space=vmem, size = 0x9000, scoped, tag = 'internal scratch']
  %s0 = inlined_call_operand.vmem [shape: f32[8,80], index: 0, kind: input, shape index: {}]
  %s1 = inlined_call_operand.vmem [shape: f32[80,128], index: 1, kind: input, shape index: {}]
  %s2 = inlined_call_operand.vmem [shape: f32[1,128], index: 2, kind: input, shape index: {}]
  %s3 = inlined_call_operand.vmem [shape: f32[128,10], index: 3, kind: input, shape index: {}]
  %s4 = inlined_call_operand.vmem [shape: f32[1,10], index: 4, kind: input, shape index: {}]
  %s5 = inlined_call_operand.hbm [shape: f32[8,10], index: 5, kind: output, shape index: {}]
  %s6 = sld [smem:[#allocation0]]
  $region30: #{tpu_custom_call.1} parent=0
    _
  %s8 = ssub.s32 1, %s6
  %s9 = scalar_select 0, %s8, %s6
  $region1: #{tpu_custom_call.1} parent=0
    #allocation2 [shape = 'u8[4096]{0}', space=vmem, size = 0x1000, scoped, tag = 'output window, operand 0, single buffered']
    #allocation3 [shape = 's32[1]{0}', space=sflag, size = 0x4, scoped, tag = 'scoped memory for tpu_custom_call.1']
    %10 = vsyncpa [#allocation3], 0
    // Predicated region
    $region2: #{tpu_custom_call.1} parent=1 // pred_check
      _
    $region3: #{tpu_custom_call.1} parent=1 // pred_check_branch
      %12 = sbr.rel (0) target = $region5
    $region4: #{tpu_custom_call.1} parent=1 // pred_region
      _
    $region5: #{tpu_custom_call.1} parent=1 // pred_fallthru
      _
    // Predicated region
    $region6: #{tpu_custom_call.1} parent=1 // pred_check
      _
    $region7: #{tpu_custom_call.1} parent=1 // pred_check_branch
      %14 = sbr.rel (0) target = $region9
    $region8: #{tpu_custom_call.1} parent=1 // pred_region
      _
    $region9: #{tpu_custom_call.1} parent=1 // pred_fallthru
      _
    // Predicated region
    $region10: #{tpu_custom_call.1} parent=1 // pred_check
      _
    $region11: #{tpu_custom_call.1} parent=1 // pred_check_branch
      %16 = sbr.rel (0) target = $region13
    $region12: #{tpu_custom_call.1} parent=1 // pred_region
      _
    $region13: #{tpu_custom_call.1} parent=1 // pred_fallthru
      _
    // Predicated region
    $region14: #{tpu_custom_call.1} parent=1 // pred_check
      _
    $region15: #{tpu_custom_call.1} parent=1 // pred_check_branch
      %18 = sbr.rel (0) target = $region17
    $region16: #{tpu_custom_call.1} parent=1 // pred_region
      _
    $region17: #{tpu_custom_call.1} parent=1 // pred_fallthru
      _
    // Predicated region
    $region18: #{tpu_custom_call.1} parent=1 // pred_check
      _
    $region19: #{tpu_custom_call.1} parent=1 // pred_check_branch
      %20 = sbr.rel (0) target = $region21
    $region20: #{tpu_custom_call.1} parent=1 // pred_region
      _
    $region21: #{tpu_custom_call.1} parent=1 // pred_fallthru
      _
    %v21 = vld [vmem:[%s0] sm:$0xff]
    %v22 = vld [vmem:[%s1] sm:$0xff]
    %v23 = vld [vmem:[%s1 + $0x8] sm:$0xff]
    %v24 = vld [vmem:[%s1 + $0x10] sm:$0xff]
    %v25 = vld [vmem:[%s1 + $0x18] sm:$0xff]
    %v26 = vld [vmem:[%s1 + $0x20] sm:$0xff]
    %v27 = vld [vmem:[%s1 + $0x28] sm:$0xff]
    %v28 = vld [vmem:[%s1 + $0x30] sm:$0xff]
    %v29 = vld [vmem:[%s1 + $0x38] sm:$0xff]
    %v30 = vld [vmem:[%s1 + $0x40] sm:$0xff]
    %v31 = vld [vmem:[%s1 + $0x48] sm:$0xff]
    %v32 = vld [vmem:[%s2] sm:$0x1]
    %v34 = vperm.slane %v32, 0
    %vm36 = vcmask 654336
    %v38 = vsel %vm36, %v21, 0
    %40 = vmatpush.msra.mxu0 0.0
    %41 = vmatpush.msra.mxu0 0.0
    %42 = vmatpush.msra.mxu0 0.0
    %43 = vmatpush.msra.mxu0 0.0
    %44 = vmatpush.msra.mxu0 0.0
    %45 = vmatpush.msra.mxu0 0.0
    %46 = vmatpush.msra.mxu0 %v31
    %47 = vmatpush.msra.mxu0 %v30
    %48 = vmatpush.msra.mxu0 %v29
    %49 = vmatpush.msra.mxu0 %v28
    %50 = vmatpush.msra.mxu0 %v27
    %51 = vmatpush.msra.mxu0 %v26
    %52 = vmatpush.msra.mxu0 %v25
    %53 = vmatpush.msra.mxu0 %v24
    %54 = vmatpush.msra.mxu0 %v23
    %55 = vmatpush.msra.mxu0 %v22
    %56 = vmatmul.f32.gmra.mxu0 %v38
    %v57 = vpop.f32.mrf.mxu0
    %v58 = vadd.f32 %v34, %v57
    %59 = vdwg.mxu0
    %v60 = vmax.f32 %v58, 0.0
    %v61 = vld [vmem:[%s3] sm:$0xff]
    %v62 = vld [vmem:[%s3 + $0x8] sm:$0xff]
    %v63 = vld [vmem:[%s3 + $0x10] sm:$0xff]
    %v64 = vld [vmem:[%s3 + $0x18] sm:$0xff]
    %v65 = vld [vmem:[%s3 + $0x20] sm:$0xff]
    %v66 = vld [vmem:[%s3 + $0x28] sm:$0xff]
    %v67 = vld [vmem:[%s3 + $0x30] sm:$0xff]
    %v68 = vld [vmem:[%s3 + $0x38] sm:$0xff]
    %v69 = vld [vmem:[%s3 + $0x40] sm:$0xff]
    %v70 = vld [vmem:[%s3 + $0x48] sm:$0xff]
    %v71 = vld [vmem:[%s3 + $0x50] sm:$0xff]
    %v72 = vld [vmem:[%s3 + $0x58] sm:$0xff]
    %v73 = vld [vmem:[%s3 + $0x60] sm:$0xff]
    %v74 = vld [vmem:[%s3 + $0x68] sm:$0xff]
    %v75 = vld [vmem:[%s3 + $0x70] sm:$0xff]
    %v76 = vld [vmem:[%s3 + $0x78] sm:$0xff]
    %v77 = vld [vmem:[%s4] sm:$0x1]
    %v79 = vperm.slane %v77, 0
    %81 = vmatpush.msra.mxu0 %v76
    %82 = vmatpush.msra.mxu0 %v75
    %83 = vmatpush.msra.mxu0 %v74
    %84 = vmatpush.msra.mxu0 %v73
    %85 = vmatpush.msra.mxu0 %v72
    %86 = vmatpush.msra.mxu0 %v71
    %87 = vmatpush.msra.mxu0 %v70
    %88 = vmatpush.msra.mxu0 %v69
    %89 = vmatpush.msra.mxu0 %v68
    %90 = vmatpush.msra.mxu0 %v67
    %91 = vmatpush.msra.mxu0 %v66
    %92 = vmatpush.msra.mxu0 %v65
    %93 = vmatpush.msra.mxu0 %v64
    %94 = vmatpush.msra.mxu0 %v63
    %95 = vmatpush.msra.mxu0 %v62
    %96 = vmatpush.msra.mxu0 %v61
    %97 = vmatmul.f32.gmra.mxu0 %v60
    %v98 = vpop.f32.mrf.mxu0
    %v99 = vadd.f32 %v79, %v98
    %100 = vdwg.mxu0
    %vm101 = vcmask 80896
    %v102 = vsel %vm101, %v99, -inf
    %103 = vmax.xlane.f32.xlu0 %v102
    %v104 = vpop.xlane.xlu0 %103
    %v105 = vsub.f32 %v99, %v104
    %v106 = vmul.f32 %v105, 1.442695
    %v107 = vpow.pop %v106
    %v108 = vsel %vm101, %v107, 0.0
    %109 = vadd.xlane.f32.xlu0 %v108
    %v110 = vpop.xlane.xlu0 %109
    %v111 = vlog2.pop %v110
    %v112 = vmul.f32 %v111, 0.6931472
    %v113 = vsub.f32 %v105, %v112
    %114 = vst.msk [vmem:[#allocation2] sm:$0xff] %vm101, %v113
    // Predicated region
    $region22: #{tpu_custom_call.1} parent=1 // pred_check
      _
    $region23: #{tpu_custom_call.1} parent=1 // pred_check_branch
      %116 = sbr.rel (0) target = $region25
    $region24: #{tpu_custom_call.1} parent=1 // pred_region
      %118 = vsyncadd [#allocation3], 0
      %s120 = sshll.u32 [#allocation2], 4
      %s121 = int_to_ptr.vmem [resolvable:$true] %s120
      %s122 = sshll.u32 %s5, 4
      %s123 = int_to_ptr.hbm [resolvable:$true] %s122
      %125 = dma.vmem_to_hbm [thread:$0]  %s121, 128, %s123, [#allocation3]
    $region25: #{tpu_custom_call.1} parent=1 // pred_fallthru
      _
    // Predicated region
    $region26: #{tpu_custom_call.1} parent=1 // pred_check
      _
    $region27: #{tpu_custom_call.1} parent=1 // pred_check_branch
      %127 = sbr.rel (0) target = $region29
    $region28: #{tpu_custom_call.1} parent=1 // pred_region
      %129 = dma.done [#allocation3], 128
    $region29: #{tpu_custom_call.1} parent=1 // pred_fallthru
      _
    %130 = vsyncpa [#allocation3], 1

</llo_original>
